<compile_context>
chip_gen: v5e
topology: v5e:2x2
jax: 0.10.0
libtpu: 0.0.40
codegen_flags: <defaults>
</compile_context>

<pallas_src>
import functools

import jax
import jax.numpy as jnp
from jax import lax
from jax.experimental import pallas as pl
from jax.experimental.pallas import tpu as pltpu

_MiB = 1024 * 1024


def _round_up(x, m):
    return ((x + m - 1) // m) * m


def _round_down(x, m):
    return max(m, (x // m) * m)


def _sublane(dtype):
    # Native sublane packing per dtype width (f32: 8, bf16: 16, int8/fp8: 32).
    return {4: 8, 2: 16, 1: 32}.get(jnp.dtype(dtype).itemsize, 8)


def _vmem_capacity_bytes():
    try:
        return int(pltpu.get_tpu_info().vmem_capacity_bytes)
    except Exception:
        return 128 * _MiB  # conservative default (v5e/v6e)


def _ratings_kernel(u_ref, v_ref, o_ref):
    # u_ref: (tm, D) user tile, v_ref: (tn, D) item tile, o_ref: (tm, tn).
    # Contract over the shared embedding dim (u @ v.T) directly on the MXU —
    # no wrapper-side transpose of the item table is needed.
    o_ref[...] = lax.dot_general(
        u_ref[...],
        v_ref[...],
        dimension_numbers=(((1,), (1,)), ((), ())),
        preferred_element_type=jnp.float32,
    ).astype(o_ref.dtype)


@functools.partial(
    jax.jit,
    static_argnames=("tm", "tn", "swap", "single_rhs_buf", "out_dtype", "vmem_limit"),
)
def _ratings_call(user_emb, item_emb, *, tm, tn, swap, single_rhs_buf,
                  out_dtype, vmem_limit):
    U, D = user_emb.shape
    I, _ = item_emb.shape
    in_bytes = user_emb.dtype.itemsize
    out_bytes = jnp.dtype(out_dtype).itemsize

    gu = pl.cdiv(U, tm)
    gi = pl.cdiv(I, tn)

    # Constant-index-map RHS (resident item table) does not need double
    # buffering — a single buffer halves its VMEM footprint.
    v_kwargs = {"pipeline_mode": pl.Buffered(1)} if single_rhs_buf else {}

    if not swap:
        # Inner axis = items: the user tile stays resident across the inner
        # loop; the item table is re-read gu times.
        grid = (gu, gi)
        u_spec = pl.BlockSpec((tm, D), lambda i, j: (i, 0))
        v_spec = pl.BlockSpec((tn, D), lambda i, j: (j, 0), **v_kwargs)
        o_spec = pl.BlockSpec((tm, tn), lambda i, j: (i, j))
    else:
        # Inner axis = users: the item tile stays resident; the user table is
        # re-read gi times (chosen when that is the smaller re-read volume).
        grid = (gi, gu)
        u_spec = pl.BlockSpec((tm, D), lambda j, i: (i, 0))
        v_spec = pl.BlockSpec((tn, D), lambda j, i: (j, 0), **v_kwargs)
        o_spec = pl.BlockSpec((tm, tn), lambda j, i: (i, j))

    cost = pl.CostEstimate(
        flops=2 * U * I * D,
        transcendentals=0,
        bytes_accessed=U * D * in_bytes + I * D * in_bytes + U * I * out_bytes,
    )

    return pl.pallas_call(
        _ratings_kernel,
        out_shape=jax.ShapeDtypeStruct((U, I), out_dtype),
        grid_spec=pltpu.PrefetchScalarGridSpec(
            num_scalar_prefetch=0,
            grid=grid,
            in_specs=[u_spec, v_spec],
            out_specs=o_spec,
        ),
        compiler_params=pltpu.CompilerParams(
            dimension_semantics=("parallel", "parallel"),
            vmem_limit_bytes=int(vmem_limit),
        ),
        cost_estimate=cost,
    )(user_emb, item_emb)


def get_all_ratings(user_emb, item_emb, *, tm=None, tn=None,
                    out_dtype=jnp.bfloat16, input_dtype=None,
                    resident_item_bytes=None):
    """score_mat = user_emb @ item_emb.T via a tiled Pallas MXU kernel.

    No padding / transposing / slicing copies in the wrapper: the grid covers
    the exact (U, I) output and Pallas masks ragged edge blocks. bf16 output by
    default (f32 accumulation inside) since the kernel is HBM-store bound.
    """
    U, D = user_emb.shape
    I, Dv = item_emb.shape
    assert D == Dv, "embedding dims must match"

    # Optional input cast (recommended on v5e: bf16 inputs halve input DMA and
    # avoid the multi-pass f32 MXU path; accumulation stays f32 either way).
    if input_dtype is not None:
        user_emb = user_emb.astype(input_dtype)
        item_emb = item_emb.astype(input_dtype)

    in_bytes = user_emb.dtype.itemsize
    out_bytes = jnp.dtype(out_dtype).itemsize
    sub_m = max(_sublane(user_emb.dtype), _sublane(out_dtype))

    # ---- generation-aware VMEM budgets ------------------------------------
    vmem_cap = _vmem_capacity_bytes()
    big_vmem = vmem_cap >= 96 * _MiB          # v5e/v6e: 128 MiB; v7x: 64 MiB
    if resident_item_bytes is None:
        resident_item_bytes = vmem_cap // 4 if big_vmem else vmem_cap // 8
    out_tile_budget = vmem_cap // 6 if big_vmem else vmem_cap // 16
    vmem_limit_cap = int(vmem_cap * 0.85)

    tm_hint = tm if tm is not None else 1024   # big tiles amortize grid-step cost
    tn_hint = tn if tn is not None else 512    # lane-dense output stores

    # ---- tile selection ----------------------------------------------------
    item_tbl_bytes = I * D * in_bytes
    tm_eff = tn_eff = None
    if item_tbl_bytes <= resident_item_bytes and (tn is None or tn >= I):
        # Resident-item path: whole item table lives in VMEM, fetched once.
        tm_cap = out_tile_budget // max(2 * I * out_bytes, 1)
        if tm_cap >= sub_m:
            tm_res = min(tm_hint, _round_down(tm_cap, sub_m))
            if tm_res >= U:
                tm_res = U
            if tm_res >= min(64, U):
                tm_eff, tn_eff = tm_res, I
    if tm_eff is None:
        # Streaming path.
        tm_eff = U if tm_hint >= U else _round_down(tm_hint, sub_m)
        tn_eff = I if tn_hint >= I else _round_down(tn_hint, 128)

    gu, gi = pl.cdiv(U, tm_eff), pl.cdiv(I, tn_eff)

    # Megacore (v7x has 2 TCs): make sure there are >= 2 parallel grid steps.
    if gu * gi < 2:
        if U >= 2 * sub_m:
            tm_eff = max(sub_m, _round_up(pl.cdiv(U, 2), sub_m))
            gu = pl.cdiv(U, tm_eff)
        elif I >= 2 * 128:
            tn_eff = max(128, _round_up(pl.cdiv(I, 2), 128))
            gi = pl.cdiv(I, tn_eff)

    # Stream the table with the smaller re-read volume (grid-axis order swap).
    traffic_noswap = U * D + gu * I * D       # items re-read once per user tile-row
    traffic_swap = I * D + gi * U * D         # users re-read once per item tile-row
    swap = traffic_swap < traffic_noswap

    single_rhs_buf = (not swap) and gi == 1   # constant RHS index map -> 1 buffer

    rhs_bufs = 1 if single_rhs_buf else 2
    need = (2 * tm_eff * D * in_bytes
            + rhs_bufs * tn_eff * D * in_bytes
            + 2 * tm_eff * tn_eff * out_bytes)
    vmem_limit = min(max(int(1.25 * need) + 2 * _MiB, 16 * _MiB), vmem_limit_cap)

    kwargs = dict(tm=tm_eff, tn=tn_eff, swap=swap,
                  out_dtype=jnp.dtype(out_dtype), vmem_limit=vmem_limit)
    try:
        return _ratings_call(user_emb, item_emb,
                             single_rhs_buf=single_rhs_buf, **kwargs)
    except Exception:
        if not single_rhs_buf:
            raise
        # Fallback if this Pallas build rejects Buffered(1): default buffering.
        return _ratings_call(user_emb, item_emb, single_rhs_buf=False, **kwargs)


class MFModel:
    """Minimal matrix-factorization 'teacher'/'student' backbone."""

    def __init__(self, key, num_users, num_items, dim, dtype=jnp.float32):
        ku, ki = jax.random.split(key)
        self.user_emb = (jax.random.normal(ku, (num_users, dim)) * 0.1).astype(dtype)
        self.item_emb = (jax.random.normal(ki, (num_items, dim)) * 0.1).astype(dtype)

    def get_all_ratings(self, **kwargs):
        return get_all_ratings(self.user_emb, self.item_emb, **kwargs)


class BaseKD:
    """JAX/Pallas mirror of the PyTorch BaseKD base class."""

    def __init__(self, args, teacher, student, frozen_teacher=True):
        self.args = args
        self.training = True
        self.teacher = teacher
        self.student = student
        self.frozen_teacher = frozen_teacher
        self.lmbda = args["lmbda"]
        # Frozen teacher: JAX arrays are immutable; "requires_grad = False"
        # maps to simply not passing teacher params to the optimizer.

    # --- abstract in the reference module --------------------------------
    def get_loss(self):
        raise NotImplementedError

    def get_ratings(self, param):
        raise NotImplementedError

    def forward(self, data):
        raise NotImplementedError

    def do_something_in_each_epoch(self, epoch):
        return

    # --- concrete pieces ---------------------------------------------------
    def train(self, mode=True):
        if not isinstance(mode, bool):
            raise ValueError("training mode is expected to be boolean")
        self.training = mode
        return self

    def eval(self):
        return self.train(False)

    def get_params_to_update(self):
        params = [self.student.user_emb, self.student.item_emb]
        if not self.frozen_teacher:
            params += [self.teacher.user_emb, self.teacher.item_emb]
        return [{"params": params, "lr": self.args["lr"],
                 "weight_decay": self.args["wd"]}]

    @property
    def param_to_save(self):
        return {"user_emb": self.student.user_emb,
                "item_emb": self.student.item_emb}

    @property
    def score_mat_to_save(self):
        # student.eval(); get_all_ratings(); restore mode — mode has no effect
        # on this pure MF score computation, so just call the kernel.
        return self.student.get_all_ratings()


if __name__ == "__main__":
    # Small, deliberately non-tile-aligned shapes to exercise ragged-edge
    # masking, the resident path, the streaming path, and the axis swap.
    NUM_USERS, NUM_ITEMS, DIM = 100, 200, 32

    key = jax.random.PRNGKey(0)
    k_teacher, k_student = jax.random.split(key)

    teacher = MFModel(k_teacher, NUM_USERS, NUM_ITEMS, DIM)
    student = MFModel(k_student, NUM_USERS, NUM_ITEMS, DIM)

    args = {"lmbda": 0.5, "lr": 1e-3, "wd": 1e-4}
    model = BaseKD(args, teacher, student, frozen_teacher=True)

    ref = student.user_emb @ student.item_emb.T

    # 1) Default path: bf16 output, resident item table (fetched from HBM once).
    score_mat = jax.block_until_ready(model.score_mat_to_save)
    assert score_mat.shape == (NUM_USERS, NUM_ITEMS)
    assert score_mat.dtype == jnp.bfloat16
    assert jnp.allclose(score_mat.astype(jnp.float32), ref, atol=2e-2, rtol=2e-2)

    # 2) f32 output, forced streaming item tiles (ragged item edge, 2-D grid).
    score_mat2 = jax.block_until_ready(
        student.get_all_ratings(tn=128, resident_item_bytes=0,
                                out_dtype=jnp.float32)
    )
    assert score_mat2.shape == (NUM_USERS, NUM_ITEMS)
    assert jnp.allclose(score_mat2, ref, atol=1e-4, rtol=1e-4)

    # 3) Swapped-role call (more rows than columns) to exercise the
    #    stream-the-smaller-table grid-order swap and a ragged row edge.
    score_mat3 = jax.block_until_ready(
        get_all_ratings(student.item_emb, student.user_emb,
                        tm=64, out_dtype=jnp.float32, resident_item_bytes=0)
    )
    assert score_mat3.shape == (NUM_ITEMS, NUM_USERS)
    assert jnp.allclose(score_mat3, ref.T, atol=1e-4, rtol=1e-4)

    print("KERNEL_OK")
</pallas_src>

<mosaic_0001>
module attributes {stable_mosaic.version = 11 : i64} {
  func.func @_ratings_kernel(%arg0: i32, %arg1: i32, %arg2: memref<64x32xf32, #tpu.memory_space<vmem>>, %arg3: memref<200x32xf32, #tpu.memory_space<vmem>>, %arg4: memref<64x200xbf16, #tpu.memory_space<vmem>>) attributes {dimension_semantics = [#tpu.dimension_semantics<parallel>, #tpu.dimension_semantics<parallel>], iteration_bounds = array<i64: 1, 2>, scalar_prefetch = 0 : i64, scratch_operands = 0 : i64, tpu.core_type = #tpu.core_type<tc>, window_params = [{transform_indices = @transform_0, window_bounds = array<i64: 64, 32>}, {transform_indices = @transform_1, window_bounds = array<i64: 200, 32>}, {transform_indices = @transform_2, window_bounds = array<i64: 64, 200>}]} {
    %c0 = arith.constant 0 : index
    %c0_0 = arith.constant 0 : index
    %0 = vector.load %arg2[%c0, %c0_0] : memref<64x32xf32, #tpu.memory_space<vmem>>, vector<64x32xf32>
    %c0_1 = arith.constant 0 : index
    %c0_2 = arith.constant 0 : index
    %1 = vector.load %arg3[%c0_1, %c0_2] : memref<200x32xf32, #tpu.memory_space<vmem>>, vector<200x32xf32>
    %cst = arith.constant dense<0.000000e+00> : vector<64x200xf32>
    %2 = tpu.matmul %0, %1, %cst {dimension_numbers = #tpu.dot_dimension_numbers<[1], [1], [0], [0], [0, 0, 1, 0], [], []>} : vector<64x32xf32>, vector<200x32xf32>, vector<64x200xf32> -> vector<64x200xf32>
    %3 = arith.truncf %2 : vector<64x200xf32> to vector<64x200xbf16>
    %c0_3 = arith.constant 0 : index
    %c0_4 = arith.constant 0 : index
    %4 = vector.load %arg4[%c0_3, %c0_4] : memref<64x200xbf16, #tpu.memory_space<vmem>>, vector<64x200xbf16>
    tpu.vector_store %arg4[%c0_3, %c0_4], %3 {strides = array<i32>} : memref<64x200xbf16, #tpu.memory_space<vmem>>, vector<64x200xbf16>,
    return
  }
  func.func @transform_0(%arg0: i32, %arg1: i32) -> (i32, i32) {
    %c0_i32 = arith.constant 0 : i32
    %c0_i32_0 = arith.constant 0 : i32
    return %arg1, %c0_i32 : i32, i32
  }
  func.func @transform_1(%arg0: i32, %arg1: i32) -> (i32, i32) {
    %c0_i32 = arith.constant 0 : i32
    %c0_i32_0 = arith.constant 0 : i32
    return %arg0, %c0_i32 : i32, i32
  }
  func.func @transform_2(%arg0: i32, %arg1: i32) -> (i32, i32) {
    %c0_i32 = arith.constant 0 : i32
    return %arg1, %arg0 : i32, i32
  }
}

</mosaic_0001>

<llo_original>
// kernel: _ratings_call.1
$region0: #{_ratings_call.1}
  #allocation0 [shape = 'u32[]', space=smem, size = 0x4, offset = 0x4, fixed_abs, tag = 'smem constant byte address 0x4 - core index']
  #allocation1 [shape = 'u32[72,128]{1,0:T(1,128)}', space=vmem, size = 0x9000, scoped, tag = 'internal scratch']
  %s0 = inlined_call_operand.vmem [shape: f32[100,32], index: 0, kind: input, shape index: {}]
  %s1 = inlined_call_operand.vmem [shape: f32[200,32], index: 1, kind: input, shape index: {}]
  %s2 = inlined_call_operand.vmem [shape: bf16[100,200], index: 2, kind: output, shape index: {}]
  %s3 = sld [smem:[#allocation0]]
  $region89: #{_ratings_call.1} parent=0
    _
  %s5 = ssub.s32 1, %s3
  %s6 = scalar_select 0, %s5, %s3
  $region1: #{_ratings_call.1} parent=0
    #allocation2 [shape = 'u8[65536]{0}', space=vmem, size = 0x10000, scoped, tag = 'output window, operand 0']
    loop: start=0, step=1, limit=4
    $region2: #{_ratings_call.1} parent=1 // loop_pre_header
      _
    $region3: #{_ratings_call.1} parent=1 // loop_header
      %s8 = sphi 0, %s12
      %p9 = scmp.ge.s32.totalorder %s8, 4
      %s15 = sphi 0, %s27
      %s16 = sphi 0, %s23
      %s17 = sphi 0, %s15
      %s18 = sphi 0, %s16
      %s19 = sphi 0, %s17
      %s20 = sphi 0, %s18
      %s30 = sphi 0, %s32
      %s33 = sphi 0, %s30
      %s34 = sphi 0, %s33
      %s50 = sphi 0, %s34
      %s56 = sphi 0, %s58
      %s59 = sphi 0, %s56
      %s60 = sphi 0, %s59
      %s76 = sphi 0, %s60
      %s84 = sphi 0, %s86
      %s87 = sphi 0, %s84
      %s88 = sphi 0, %s87
      %s104 = sphi 0, %s88
    $region4: #{_ratings_call.1} parent=1 // loop_header_branch
      %11 = sbr.rel (%p9) target = $region8
    $region5: #{_ratings_call.1} parent=1 // loop_body
      %s13 = ssub.s32 %s8, 1
      %s14 = ssub.s32 %s8, 2
      %s21 = sadd.s32 1, %s16
      %p22 = scmp.ge.s32.totalorder %s21, 2
      %s23 = scalar_select %p22, 0, %s21
      %s24 = sadd.s32 1, %s15
      %s25 = scalar_select %p22, %s24, %s15
      %p26 = scmp.ge.s32.totalorder %s25, 1
      %s27 = scalar_select %p26, 0, %s25
      %s28 = ssub.s32 %s16, %s23
      %p29 = scmp.eq.s32.totalorder %s28, 0
      %s31 = sadd.s32 %s30, 1
      %s32 = scalar_select %p29, %s30, %s31
      %p35 = pneg %p29
      %p36 = scmp.eq.s32.totalorder %s8, 1
      %p37 = por %p35, %p36
      %p38 = scmp.ne.s32.totalorder %s30, %s33
      %p39 = scmp.eq.s32.totalorder %s8, 0
      %p40 = por %p38, %p39
      %p41 = scmp.ne.s32.totalorder %s30, %s33
      %p42 = scmp.eq.s32.totalorder %s13, 1
      %p43 = por %p41, %p42
      %p44 = scmp.ne.s32.totalorder %s33, %s34
      %p45 = scmp.eq.s32.totalorder %s13, 0
      %p46 = por %p44, %p45
      %p47 = scmp.ne.s32.totalorder %s33, %s34
      %p48 = scmp.eq.s32.totalorder %s14, 1
      %p49 = por %p47, %p48
      %p51 = scmp.ne.s32.totalorder %s34, %s50
      %p52 = scmp.eq.s32.totalorder %s14, 0
      %p53 = por %p51, %p52
      %s54 = ssub.s32 %s15, %s27
      %p55 = scmp.eq.s32.totalorder %s54, 0
      %s57 = sadd.s32 %s56, 1
      %s58 = scalar_select %p55, %s56, %s57
      %p61 = pneg %p55
      %p62 = scmp.eq.s32.totalorder %s8, 1
      %p63 = por %p61, %p62
      %p64 = scmp.ne.s32.totalorder %s56, %s59
      %p65 = scmp.eq.s32.totalorder %s8, 0
      %p66 = por %p64, %p65
      %p67 = scmp.ne.s32.totalorder %s56, %s59
      %p68 = scmp.eq.s32.totalorder %s13, 1
      %p69 = por %p67, %p68
      %p70 = scmp.ne.s32.totalorder %s59, %s60
      %p71 = scmp.eq.s32.totalorder %s13, 0
      %p72 = por %p70, %p71
      %p73 = scmp.ne.s32.totalorder %s59, %s60
      %p74 = scmp.eq.s32.totalorder %s14, 1
      %p75 = por %p73, %p74
      %p77 = scmp.ne.s32.totalorder %s60, %s76
      %p78 = scmp.eq.s32.totalorder %s14, 0
      %p79 = por %p77, %p78
      %s80 = ssub.s32 %s16, %s23
      %s81 = ssub.s32 %s15, %s27
      %s82 = sor.u32 %s80, %s81
      %p83 = scmp.eq.s32.totalorder %s82, 0
      %s85 = sadd.s32 %s84, 1
      %s86 = scalar_select %p83, %s84, %s85
      %p89 = pneg %p83
      %p90 = scmp.eq.s32.totalorder %s8, 1
      %p91 = por %p89, %p90
      %p92 = scmp.ne.s32.totalorder %s84, %s87
      %p93 = scmp.eq.s32.totalorder %s8, 0
      %p94 = por %p92, %p93
      %p95 = scmp.ne.s32.totalorder %s84, %s87
      %p96 = scmp.eq.s32.totalorder %s13, 1
      %p97 = por %p95, %p96
      %p98 = scmp.ne.s32.totalorder %s87, %s88
      %p99 = scmp.eq.s32.totalorder %s13, 0
      %p100 = por %p98, %p99
      %p101 = scmp.ne.s32.totalorder %s87, %s88
      %p102 = scmp.eq.s32.totalorder %s14, 1
      %p103 = por %p101, %p102
      %p105 = scmp.ne.s32.totalorder %s88, %s104
      %p106 = scmp.eq.s32.totalorder %s14, 0
      %p107 = por %p105, %p106
      %p108 = scmp.le.s32.totalorder 1, %s8
      %p109 = scmp.lt.s32.totalorder %s8, 3
      %p110 = pnand %p108, %p109
      %p111 = pneg %p110
      // Predicated region
      $region9: #{_ratings_call.1} parent=5 // pred_check
        _
      $region10: #{_ratings_call.1} parent=5 // pred_check_branch
        %113 = sbr.rel (%p110) target = $region12
      $region11: #{_ratings_call.1} parent=5 // pred_region
        %s114 = ssub.s32 %s8, 1
        // Predicated region
        $region13: #{_ratings_call.1} parent=11 // pred_check
          %p115 = pneg %p72
        $region14: #{_ratings_call.1} parent=11 // pred_check_branch
          %117 = sbr.rel (%p115) target = $region16
        $region15: #{_ratings_call.1} parent=11 // pred_region
          %s118 = smul.u32 25, %s17
          %p119 = scmp.lt.s32.totalorder %s118, 24
          %s120 = scalar_select %p119, %s118, 24
          %s121 = smul.addr %s120, 8
          %s122 = scalar_lea.vmem %s1, %s121
          %s123 = smul.u32 25, %s17
        $region16: #{_ratings_call.1} parent=11 // pred_fallthru
          _
      $region12: #{_ratings_call.1} parent=5 // pred_fallthru
        _
      %p124 = scmp.lt.s32.totalorder %s8, 2
      // Predicated region
      $region17: #{_ratings_call.1} parent=5 // pred_check
        %p125 = pneg %p124
      $region18: #{_ratings_call.1} parent=5 // pred_check_branch
        %127 = sbr.rel (%p125) target = $region20
      $region19: #{_ratings_call.1} parent=5 // pred_region
        // Predicated region
        $region21: #{_ratings_call.1} parent=19 // pred_check
          %p128 = pneg %p40
        $region22: #{_ratings_call.1} parent=19 // pred_check_branch
          %130 = sbr.rel (%p128) target = $region24
        $region23: #{_ratings_call.1} parent=19 // pred_region
          %s131 = smul.u32 8, %s16
          %s132 = ssub.s32 13, %s131
          %p133 = scmp.lt.s32.totalorder %s132, 8
          %s134 = scalar_select %p133, %s132, 8
          %s135 = smul.u32 8, %s134
          %p136 = scmp.lt.s32.totalorder %s131, 12
          %s137 = scalar_select %p136, %s131, 12
          %s138 = smul.addr %s137, 8
          %s139 = scalar_lea.vmem %s0, %s138
          %s140 = smul.u32 8, %s16
          %s141 = ssub.s32 13, %s140
          %p142 = scmp.lt.s32.totalorder %s141, 8
          %s143 = scalar_select %p142, %s141, 8
          %s144 = smul.u32 8, %s143
        $region24: #{_ratings_call.1} parent=19 // pred_fallthru
          _
      $region20: #{_ratings_call.1} parent=5 // pred_fallthru
        _
      %p145 = scmp.le.s32.totalorder 1, %s8
      %p146 = scmp.lt.s32.totalorder %s8, 3
      %p147 = pnand %p145, %p146
      %p148 = pneg %p147
      // Predicated region
      $region25: #{_ratings_call.1} parent=5 // pred_check
        _
      $region26: #{_ratings_call.1} parent=5 // pred_check_branch
        %150 = sbr.rel (%p147) target = $region28
      $region27: #{_ratings_call.1} parent=5 // pred_region
        %s151 = ssub.s32 %s8, 1
        %s152 = smul.u32 8, %s18
        %s153 = ssub.s32 13, %s152
        %p154 = scmp.lt.s32.totalorder %s153, 8
        %s155 = scalar_select %p154, %s153, 8
        %s156 = smul.u32 8, %s155
        %p157 = scmp.lt.s32.totalorder %s152, 12
        %s158 = scalar_select %p157, %s152, 12
        %s159 = smul.addr %s158, 8
        %s160 = scalar_lea.vmem %s0, %s159
        %p161 = pneg %p46
        %p162 = pneg %p43
        %s163 = smul.u32 25, %s17
        %p164 = scmp.lt.s32.totalorder %s163, 24
        %s165 = scalar_select %p164, %s163, 24
        %s166 = smul.addr %s165, 8
        %s167 = scalar_lea.vmem %s1, %s166
        %p168 = pneg %p72
        %p169 = pneg %p69
        %p170 = pneg %p100
        %p171 = pneg %p97
        %s172 = sand.u32 %s87, 1
        %s173 = sand.u32 %s87, 1
        %s174 = smul.addr %s173, 64
        %s175 = scalar_lea.vmem [#allocation2], %s174
        %s176 = smul.u32 8, %s18
        %s177 = ssub.s32 13, %s176
        %p178 = scmp.lt.s32.totalorder %s177, 8
        %s179 = scalar_select %p178, %s177, 8
        %s180 = smul.u32 8, %s179
        %p181 = scmp.lt.s32.totalorder %s176, 12
        %s182 = scalar_select %p181, %s176, 12
        %s183 = smul.addr %s182, 8
        %s184 = scalar_lea.vmem %s0, %s183
        %s185 = smul.u32 8, %s18
        %s186 = ssub.s32 13, %s185
        %p187 = scmp.lt.s32.totalorder %s186, 8
        %s188 = scalar_select %p187, %s186, 8
        %s189 = smul.u32 8, %s188
        %s190 = smul.u32 25, %s17
        %p191 = scmp.lt.s32.totalorder %s190, 24
        %s192 = scalar_select %p191, %s190, 24
        %s193 = smul.addr %s192, 8
        %s194 = scalar_lea.vmem %s1, %s193
        %s195 = smul.u32 25, %s17
        %s196 = smul.u32 8, %s18
        %s197 = smul.u32 2, %s17
        %s198 = ssub.s32 13, %s196
        %p199 = scmp.lt.s32.totalorder %s198, 8
        %s200 = scalar_select %p199, %s198, 8
        %s201 = smul.u32 4, %s200
        %s202 = smul.u32 %s201, 2
        %v203 = vld [vmem:[%s184] sm:$0xff]
        %v204 = vld [vmem:[%s184 + $0x8] sm:$0xff]
        %v205 = vld [vmem:[%s184 + $0x10] sm:$0xff]
        %v206 = vld [vmem:[%s184 + $0x18] sm:$0xff]
        %v207 = vld [vmem:[%s184 + $0x20] sm:$0xff]
        %v208 = vld [vmem:[%s184 + $0x28] sm:$0xff]
        %v209 = vld [vmem:[%s184 + $0x30] sm:$0xff]
        %v210 = vld [vmem:[%s184 + $0x38] sm:$0xff]
        %v211 = vld [vmem:[%s194] sm:$0xff]
        %v212 = vld [vmem:[%s194 + $0x8] sm:$0xff]
        %v213 = vld [vmem:[%s194 + $0x10] sm:$0xff]
        %v214 = vld [vmem:[%s194 + $0x18] sm:$0xff]
        %v215 = vld [vmem:[%s194 + $0x20] sm:$0xff]
        %v216 = vld [vmem:[%s194 + $0x28] sm:$0xff]
        %v217 = vld [vmem:[%s194 + $0x30] sm:$0xff]
        %v218 = vld [vmem:[%s194 + $0x38] sm:$0xff]
        %v219 = vld [vmem:[%s194 + $0x40] sm:$0xff]
        %v220 = vld [vmem:[%s194 + $0x48] sm:$0xff]
        %v221 = vld [vmem:[%s194 + $0x50] sm:$0xff]
        %v222 = vld [vmem:[%s194 + $0x58] sm:$0xff]
        %v223 = vld [vmem:[%s194 + $0x60] sm:$0xff]
        %v224 = vld [vmem:[%s194 + $0x68] sm:$0xff]
        %v225 = vld [vmem:[%s194 + $0x70] sm:$0xff]
        %v226 = vld [vmem:[%s194 + $0x78] sm:$0xff]
        %v227 = vld [vmem:[%s194 + $0x80] sm:$0xff]
        %v228 = vld [vmem:[%s194 + $0x88] sm:$0xff]
        %v229 = vld [vmem:[%s194 + $0x90] sm:$0xff]
        %v230 = vld [vmem:[%s194 + $0x98] sm:$0xff]
        %v231 = vld [vmem:[%s194 + $0xa0] sm:$0xff]
        %v232 = vld [vmem:[%s194 + $0xa8] sm:$0xff]
        %v233 = vld [vmem:[%s194 + $0xb0] sm:$0xff]
        %v234 = vld [vmem:[%s194 + $0xb8] sm:$0xff]
        %v235 = vld [vmem:[%s194 + $0xc0] sm:$0xff]
        %vm236 = vcmask 261120
        %v238 = vsel %vm236, %v203, 0
        %v241 = vsel %vm236, %v204, 0
        %v244 = vsel %vm236, %v205, 0
        %v247 = vsel %vm236, %v206, 0
        %v250 = vsel %vm236, %v207, 0
        %v253 = vsel %vm236, %v208, 0
        %v256 = vsel %vm236, %v209, 0
        %v259 = vsel %vm236, %v210, 0
        %v262 = vsel %vm236, %v211, 0
        %v265 = vsel %vm236, %v212, 0
        %v268 = vsel %vm236, %v213, 0
        %v271 = vsel %vm236, %v214, 0
        %v274 = vsel %vm236, %v215, 0
        %v277 = vsel %vm236, %v216, 0
        %v280 = vsel %vm236, %v217, 0
        %v283 = vsel %vm236, %v218, 0
        %v286 = vsel %vm236, %v219, 0
        %v289 = vsel %vm236, %v220, 0
        %v292 = vsel %vm236, %v221, 0
        %v295 = vsel %vm236, %v222, 0
        %v298 = vsel %vm236, %v223, 0
        %v301 = vsel %vm236, %v224, 0
        %v304 = vsel %vm236, %v225, 0
        %v307 = vsel %vm236, %v226, 0
        %v310 = vsel %vm236, %v227, 0
        %v313 = vsel %vm236, %v228, 0
        %v316 = vsel %vm236, %v229, 0
        %v319 = vsel %vm236, %v230, 0
        %v322 = vsel %vm236, %v231, 0
        %v325 = vsel %vm236, %v232, 0
        %v328 = vsel %vm236, %v233, 0
        %v331 = vsel %vm236, %v234, 0
        %v334 = vsel %vm236, %v235, 0
        %336 = vmatpush.xpose.msra.mxu0 %v307
        %337 = vmatpush.xpose.msra.mxu0 %v304
        %338 = vmatpush.xpose.msra.mxu0 %v301
        %339 = vmatpush.xpose.msra.mxu0 %v298
        %340 = vmatpush.xpose.msra.mxu0 %v295
        %341 = vmatpush.xpose.msra.mxu0 %v292
        %342 = vmatpush.xpose.msra.mxu0 %v289
        %343 = vmatpush.xpose.msra.mxu0 %v286
        %344 = vmatpush.xpose.msra.mxu0 %v283
        %345 = vmatpush.xpose.msra.mxu0 %v280
        %346 = vmatpush.xpose.msra.mxu0 %v277
        %347 = vmatpush.xpose.msra.mxu0 %v274
        %348 = vmatpush.xpose.msra.mxu0 %v271
        %349 = vmatpush.xpose.msra.mxu0 %v268
        %350 = vmatpush.xpose.msra.mxu0 %v265
        %351 = vmatpush.xpose.msra.mxu0 %v262
        %352 = vmatmul.f32.gmra.mxu0 %v238
        %v353 = vpop.f32.mrf.mxu0
        %v354 = vadd.f32 0.0, %v353
        %355 = vmatmul.f32.gmra.mxu0 %v241
        %v356 = vpop.f32.mrf.mxu0
        %v357 = vadd.f32 0.0, %v356
        %358 = vmatmul.f32.gmra.mxu0 %v244
        %v359 = vpop.f32.mrf.mxu0
        %v360 = vadd.f32 0.0, %v359
        %361 = vmatmul.f32.gmra.mxu0 %v247
        %v362 = vpop.f32.mrf.mxu0
        %v363 = vadd.f32 0.0, %v362
        %364 = vmatmul.f32.gmra.mxu0 %v250
        %v365 = vpop.f32.mrf.mxu0
        %v366 = vadd.f32 0.0, %v365
        %367 = vmatmul.f32.gmra.mxu0 %v253
        %v368 = vpop.f32.mrf.mxu0
        %v369 = vadd.f32 0.0, %v368
        %370 = vmatmul.f32.gmra.mxu0 %v256
        %v371 = vpop.f32.mrf.mxu0
        %v372 = vadd.f32 0.0, %v371
        %373 = vmatmul.f32.gmra.mxu0 %v259
        %v374 = vpop.f32.mrf.mxu0
        %v375 = vadd.f32 0.0, %v374
        %376 = vdwg.mxu0
        %377 = vmatpush.xpose.msra.mxu0 0.0
        %378 = vmatpush.xpose.msra.mxu0 0.0
        %379 = vmatpush.xpose.msra.mxu0 0.0
        %380 = vmatpush.xpose.msra.mxu0 0.0
        %381 = vmatpush.xpose.msra.mxu0 0.0
        %382 = vmatpush.xpose.msra.mxu0 0.0
        %383 = vmatpush.xpose.msra.mxu0 0.0
        %384 = vmatpush.xpose.msra.mxu0 %v334
        %385 = vmatpush.xpose.msra.mxu0 %v331
        %386 = vmatpush.xpose.msra.mxu0 %v328
        %387 = vmatpush.xpose.msra.mxu0 %v325
        %388 = vmatpush.xpose.msra.mxu0 %v322
        %389 = vmatpush.xpose.msra.mxu0 %v319
        %390 = vmatpush.xpose.msra.mxu0 %v316
        %391 = vmatpush.xpose.msra.mxu0 %v313
        %392 = vmatpush.xpose.msra.mxu0 %v310
        %393 = vmatmul.f32.gmra.mxu0 %v238
        %v394 = vpop.f32.mrf.mxu0
        %v395 = vadd.f32 0.0, %v394
        %396 = vmatmul.f32.gmra.mxu0 %v241
        %v397 = vpop.f32.mrf.mxu0
        %v398 = vadd.f32 0.0, %v397
        %399 = vmatmul.f32.gmra.mxu0 %v244
        %v400 = vpop.f32.mrf.mxu0
        %v401 = vadd.f32 0.0, %v400
        %402 = vmatmul.f32.gmra.mxu0 %v247
        %v403 = vpop.f32.mrf.mxu0
        %v404 = vadd.f32 0.0, %v403
        %405 = vmatmul.f32.gmra.mxu0 %v250
        %v406 = vpop.f32.mrf.mxu0
        %v407 = vadd.f32 0.0, %v406
        %408 = vmatmul.f32.gmra.mxu0 %v253
        %v409 = vpop.f32.mrf.mxu0
        %v410 = vadd.f32 0.0, %v409
        %411 = vmatmul.f32.gmra.mxu0 %v256
        %v412 = vpop.f32.mrf.mxu0
        %v413 = vadd.f32 0.0, %v412
        %414 = vmatmul.f32.gmra.mxu0 %v259
        %v415 = vpop.f32.mrf.mxu0
        %v416 = vadd.f32 0.0, %v415
        %417 = vdwg.mxu0
        %v418 = vpack.c.bf16 %v395, %v354
        %v419 = vpack.c.bf16 %v398, %v357
        %v420 = vpack.c.bf16 %v401, %v360
        %v421 = vpack.c.bf16 %v404, %v363
        %v422 = vpack.c.bf16 %v407, %v366
        %v423 = vpack.c.bf16 %v410, %v369
        %v424 = vpack.c.bf16 %v413, %v372
        %v425 = vpack.c.bf16 %v416, %v375
        %vm426 = vcmask 1043456
        %vm427 = vcmask 588804
        %vm428 = vmor %vm427, %vm426
        %429 = vst.msk [vmem:[%s175] sm:$0xff] %vm428, %v418
        %430 = vst.msk [vmem:[%s175 + $0x8] sm:$0xff] %vm428, %v419
        %431 = vst.msk [vmem:[%s175 + $0x10] sm:$0xff] %vm428, %v420
        %432 = vst.msk [vmem:[%s175 + $0x18] sm:$0xff] %vm428, %v421
        %433 = vst.msk [vmem:[%s175 + $0x20] sm:$0xff] %vm428, %v422
        %434 = vst.msk [vmem:[%s175 + $0x28] sm:$0xff] %vm428, %v423
        %435 = vst.msk [vmem:[%s175 + $0x30] sm:$0xff] %vm428, %v424
        %436 = vst.msk [vmem:[%s175 + $0x38] sm:$0xff] %vm428, %v425
        %s437 = sand.u32 %s87, 1
        %s438 = sand.u32 %s87, 1
        %s439 = smul.addr %s438, 64
        %s440 = scalar_lea.vmem [#allocation2], %s439
        // Predicated region
        $region29: #{_ratings_call.1} parent=27 // pred_check
          %p441 = pneg %p97
        $region30: #{_ratings_call.1} parent=27 // pred_check_branch
          %443 = sbr.rel (%p441) target = $region32
        $region31: #{_ratings_call.1} parent=27 // pred_region
          %s444 = smul.u32 8, %s18
          %s445 = smul.u32 2, %s17
          %s446 = ssub.s32 13, %s444
          %p447 = scmp.lt.s32.totalorder %s446, 8
          %s448 = scalar_select %p447, %s446, 8
          %s449 = smul.u32 4, %s448
          %s450 = smul.u32 %s449, 2
          %p451 = scmp.ne.s32.totalorder 0, %s450
          %s452 = smul.addr %s444, 2
          %s453 = sadd.s32 %s445, %s452
          %s454 = smul.addr %s453, 4
          %s455 = scalar_lea.vmem %s2, %s454
          // Predicated region
          $region33: #{_ratings_call.1} parent=31 // pred_check
            %p456 = pneg %p451
          $region34: #{_ratings_call.1} parent=31 // pred_check_branch
            %458 = sbr.rel (%p456) target = $region36
          $region35: #{_ratings_call.1} parent=31 // pred_region
            // Predicated region
            $region37: #{_ratings_call.1} parent=35 // pred_check
              _
            $region38: #{_ratings_call.1} parent=35 // pred_check_branch
              %460 = sbr.rel (0) target = $region40
            $region39: #{_ratings_call.1} parent=35 // pred_region
              // Predicated region
              $region59: #{_ratings_call.1} parent=39 // pred_check
                _
              $region60: #{_ratings_call.1} parent=39 // pred_check_branch
                %524 = sbr.rel (0) target = $region62
              $region61: #{_ratings_call.1} parent=39 // pred_region
                %s525 = sshrl.u32 %s448, 3
                // While loop
                $region63: #{_ratings_call.1} parent=61 // loop_pre_header
                  _
                $region64: #{_ratings_call.1} parent=61 // loop_header
                  %s527 = sphi 0, %s529
                  %p528 = scmp.ge.s32.totalorder %s527, %s525
                  %s532 = sphi 0, %s553
                  %s533 = sphi %s440, %s556
                  %s534 = sphi %s455, %s557
                $region65: #{_ratings_call.1} parent=61 // loop_header_branch
                  %531 = sbr.rel (%p528) target = $region69
                $region66: #{_ratings_call.1} parent=61 // loop_body
                  %v535 = vld [vmem:[%s533] sm:$0xff]
                  %536 = vst [vmem:[%s534] sm:$0xff] %v535
                  %v537 = vld [vmem:[%s533 + $0x8] sm:$0xff]
                  %538 = vst [vmem:[%s534 + $0x8] sm:$0xff] %v537
                  %v539 = vld [vmem:[%s533 + $0x10] sm:$0xff]
                  %540 = vst [vmem:[%s534 + $0x10] sm:$0xff] %v539
                  %v541 = vld [vmem:[%s533 + $0x18] sm:$0xff]
                  %542 = vst [vmem:[%s534 + $0x18] sm:$0xff] %v541
                  %v543 = vld [vmem:[%s533 + $0x20] sm:$0xff]
                  %544 = vst [vmem:[%s534 + $0x20] sm:$0xff] %v543
                  %v545 = vld [vmem:[%s533 + $0x28] sm:$0xff]
                  %546 = vst [vmem:[%s534 + $0x28] sm:$0xff] %v545
                  %v547 = vld [vmem:[%s533 + $0x30] sm:$0xff]
                  %548 = vst [vmem:[%s534 + $0x30] sm:$0xff] %v547
                  %v549 = vld [vmem:[%s533 + $0x38] sm:$0xff]
                  %550 = vst [vmem:[%s534 + $0x38] sm:$0xff] %v549
                  %s551 = sadd.s32 1, %s532
                  %p552 = scmp.ge.s32.totalorder %s551, %s525
                  %s553 = scalar_select %p552, 0, %s551
                  %s554 = smul.u32 %s553, 64
                  %s555 = smul.u32 %s553, 64
                  %s556 = scalar_lea.vmem %s440, %s554 [#allocation2]
                  %s557 = scalar_lea.vmem %s455, %s555
                $region67: #{_ratings_call.1} parent=61 // loop_footer
                  %s529 = sadd.s32 %s527, 1
                $region68: #{_ratings_call.1} parent=61 // loop_footer_branch
                  %526 = sbr.rel target = $region64
                $region69: #{_ratings_call.1} parent=61 // loop_exit
                  _
                %s558 = sshrl.u32 %s448, 3
                %s559 = sand.u32 %s448, 7
                %s560 = smul.u32 %s558, 8
                %s561 = smul.u32 8, %s560
                %s562 = scalar_lea.vmem %s440, %s561 [#allocation2]
                %s563 = smul.u32 8, %s560
                %s564 = scalar_lea.vmem %s455, %s563
                // While loop
                $region70: #{_ratings_call.1} parent=61 // loop_pre_header
                  _
                $region71: #{_ratings_call.1} parent=61 // loop_header
                  %s566 = sphi 0, %s568
                  %p567 = scmp.ge.s32.totalorder %s566, %s559
                  %s571 = sphi 0, %s578
                  %s572 = sphi %s562, %s581
                  %s573 = sphi %s564, %s582
                $region72: #{_ratings_call.1} parent=61 // loop_header_branch
                  %570 = sbr.rel (%p567) target = $region76
                $region73: #{_ratings_call.1} parent=61 // loop_body
                  %v574 = vld [vmem:[%s572] sm:$0xff]
                  %575 = vst [vmem:[%s573] sm:$0xff] %v574
                  %s576 = sadd.s32 1, %s571
                  %p577 = scmp.ge.s32.totalorder %s576, %s559
                  %s578 = scalar_select %p577, 0, %s576
                  %s579 = smul.u32 %s578, 8
                  %s580 = smul.u32 %s578, 8
                  %s581 = scalar_lea.vmem %s562, %s579 [#allocation2]
                  %s582 = scalar_lea.vmem %s564, %s580
                $region74: #{_ratings_call.1} parent=61 // loop_footer
                  %s568 = sadd.s32 %s566, 1
                $region75: #{_ratings_call.1} parent=61 // loop_footer_branch
                  %565 = sbr.rel target = $region71
                $region76: #{_ratings_call.1} parent=61 // loop_exit
                  _
              $region62: #{_ratings_call.1} parent=39 // pred_fallthru
                _
              // Predicated region
              $region77: #{_ratings_call.1} parent=39 // pred_check
                _
              $region78: #{_ratings_call.1} parent=39 // pred_check_branch
                %584 = sbr.rel target = $region80
              $region79: #{_ratings_call.1} parent=39 // pred_region
                _
              $region80: #{_ratings_call.1} parent=39 // pred_fallthru
                _
            $region40: #{_ratings_call.1} parent=35 // pred_fallthru
              _
            // Predicated region
            $region41: #{_ratings_call.1} parent=35 // pred_check
              _
            $region42: #{_ratings_call.1} parent=35 // pred_check_branch
              %462 = sbr.rel target = $region44
            $region43: #{_ratings_call.1} parent=35 // pred_region
              %s464 = ssub.s32 256, 1
              %s465 = sshrl.u32 %s448, 3
              // While loop
              $region45: #{_ratings_call.1} parent=43 // loop_pre_header
                _
              $region46: #{_ratings_call.1} parent=43 // loop_header
                %s467 = sphi 0, %s469
                %p468 = scmp.ge.s32.totalorder %s467, %s465
                %s472 = sphi 0, %s493
                %s473 = sphi %s440, %s496
                %s474 = sphi %s455, %s497
              $region47: #{_ratings_call.1} parent=43 // loop_header_branch
                %471 = sbr.rel (%p468) target = $region51
              $region48: #{_ratings_call.1} parent=43 // loop_body
                %v475 = vld [vmem:[%s473] sm:%s464]
                %476 = vst [vmem:[%s474] sm:%s464] %v475
                %v477 = vld [vmem:[%s473 + $0x8] sm:%s464]
                %478 = vst [vmem:[%s474 + $0x8] sm:%s464] %v477
                %v479 = vld [vmem:[%s473 + $0x10] sm:%s464]
                %480 = vst [vmem:[%s474 + $0x10] sm:%s464] %v479
                %v481 = vld [vmem:[%s473 + $0x18] sm:%s464]
                %482 = vst [vmem:[%s474 + $0x18] sm:%s464] %v481
                %v483 = vld [vmem:[%s473 + $0x20] sm:%s464]
                %484 = vst [vmem:[%s474 + $0x20] sm:%s464] %v483
                %v485 = vld [vmem:[%s473 + $0x28] sm:%s464]
                %486 = vst [vmem:[%s474 + $0x28] sm:%s464] %v485
                %v487 = vld [vmem:[%s473 + $0x30] sm:%s464]
                %488 = vst [vmem:[%s474 + $0x30] sm:%s464] %v487
                %v489 = vld [vmem:[%s473 + $0x38] sm:%s464]
                %490 = vst [vmem:[%s474 + $0x38] sm:%s464] %v489
                %s491 = sadd.s32 1, %s472
                %p492 = scmp.ge.s32.totalorder %s491, %s465
                %s493 = scalar_select %p492, 0, %s491
                %s494 = smul.u32 %s493, 64
                %s495 = smul.u32 %s493, 64
                %s496 = scalar_lea.vmem %s440, %s494 [#allocation2]
                %s497 = scalar_lea.vmem %s455, %s495
              $region49: #{_ratings_call.1} parent=43 // loop_footer
                %s469 = sadd.s32 %s467, 1
              $region50: #{_ratings_call.1} parent=43 // loop_footer_branch
                %466 = sbr.rel target = $region46
              $region51: #{_ratings_call.1} parent=43 // loop_exit
                _
              %s498 = sshrl.u32 %s448, 3
              %s499 = sand.u32 %s448, 7
              %s500 = smul.u32 %s498, 8
              %s501 = smul.u32 8, %s500
              %s502 = scalar_lea.vmem %s440, %s501 [#allocation2]
              %s503 = smul.u32 8, %s500
              %s504 = scalar_lea.vmem %s455, %s503
              // While loop
              $region52: #{_ratings_call.1} parent=43 // loop_pre_header
                _
              $region53: #{_ratings_call.1} parent=43 // loop_header
                %s506 = sphi 0, %s508
                %p507 = scmp.ge.s32.totalorder %s506, %s499
                %s511 = sphi 0, %s518
                %s512 = sphi %s502, %s521
                %s513 = sphi %s504, %s522
              $region54: #{_ratings_call.1} parent=43 // loop_header_branch
                %510 = sbr.rel (%p507) target = $region58
              $region55: #{_ratings_call.1} parent=43 // loop_body
                %v514 = vld [vmem:[%s512] sm:%s464]
                %515 = vst [vmem:[%s513] sm:%s464] %v514
                %s516 = sadd.s32 1, %s511
                %p517 = scmp.ge.s32.totalorder %s516, %s499
                %s518 = scalar_select %p517, 0, %s516
                %s519 = smul.u32 %s518, 8
                %s520 = smul.u32 %s518, 8
                %s521 = scalar_lea.vmem %s502, %s519 [#allocation2]
                %s522 = scalar_lea.vmem %s504, %s520
              $region56: #{_ratings_call.1} parent=43 // loop_footer
                %s508 = sadd.s32 %s506, 1
              $region57: #{_ratings_call.1} parent=43 // loop_footer_branch
                %505 = sbr.rel target = $region53
              $region58: #{_ratings_call.1} parent=43 // loop_exit
                _
            $region44: #{_ratings_call.1} parent=35 // pred_fallthru
              _
          $region36: #{_ratings_call.1} parent=31 // pred_fallthru
            _
          %585 = vnop
        $region32: #{_ratings_call.1} parent=27 // pred_fallthru
          _
      $region28: #{_ratings_call.1} parent=5 // pred_fallthru
        _
      %p586 = scmp.le.s32.totalorder 2, %s8
      // Predicated region
      $region81: #{_ratings_call.1} parent=5 // pred_check
        %p587 = pneg %p586
      $region82: #{_ratings_call.1} parent=5 // pred_check_branch
        %589 = sbr.rel (%p587) target = $region84
      $region83: #{_ratings_call.1} parent=5 // pred_region
        %s590 = ssub.s32 %s8, 2
        // Predicated region
        $region85: #{_ratings_call.1} parent=83 // pred_check
          %p591 = pneg %p103
        $region86: #{_ratings_call.1} parent=83 // pred_check_branch
          %593 = sbr.rel (%p591) target = $region88
        $region87: #{_ratings_call.1} parent=83 // pred_region
          %s594 = sand.u32 %s88, 1
          %s595 = sand.u32 %s88, 1
          %s596 = smul.addr %s595, 64
          %s597 = scalar_lea.vmem [#allocation2], %s596
        $region88: #{_ratings_call.1} parent=83 // pred_fallthru
          _
      $region84: #{_ratings_call.1} parent=5 // pred_fallthru
        _
    $region6: #{_ratings_call.1} parent=1 // loop_footer
      %s12 = sadd.s32 1, %s8
    $region7: #{_ratings_call.1} parent=1 // loop_footer_branch
      %7 = sbr.rel target = $region3
    $region8: #{_ratings_call.1} parent=1 // loop_exit
      _

</llo_original>
